<compile_context>
chip_gen: v6e
topology: v6e:2x2x1
jax: 0.10.0
libtpu: 0.0.40
codegen_flags: <defaults>
</compile_context>

<pallas_src>
import functools

import jax
import jax.numpy as jnp
from jax.experimental import pallas as pl
from jax.experimental.pallas import tpu as pltpu

HIDDEN = 64
HIDDEN_PAD = 128  # lane/sublane-friendly hidden width
LANE = 128


def _round_up(x, m):
    return ((x + m - 1) // m) * m


def _mlp_kernel(xt_ref, w1t_ref, b1_ref, w2t_ref, b2_ref, w3_ref, b3_ref, o_ref):
    # Transposed space: batch lives on the lane axis.
    #   xt:  (D, TB) bf16          w1t: (128, D) bf16   b1: (128, 1) f32
    #   w2t: (128, 128) bf16       b2:  (128, 1) f32
    #   w3:  (128, 1) f32          b3:  (1, 1) f32       out: (1, TB) f32
    xt = xt_ref[...]

    # fc1: (128, D) @ (D, TB) -> (128, TB), f32 accumulate, bias + ReLU on VPU.
    h1 = jnp.dot(w1t_ref[...], xt, preferred_element_type=jnp.float32)
    h1 = jnp.maximum(h1 + b1_ref[...], 0.0)

    # Dropout(0.3): identity in eval mode.

    # fc2: (128, 128) @ (128, TB) -> (128, TB).
    h2 = jnp.dot(w2t_ref[...], h1.astype(jnp.bfloat16),
                 preferred_element_type=jnp.float32)
    h2 = jnp.maximum(h2 + b2_ref[...], 0.0)

    # fc3: N=1 output -> VPU multiply + sublane reduce (no MXU round trip),
    # result is the lane-dense row (1, TB).
    z = jnp.sum(h2 * w3_ref[...], axis=0, keepdims=True) + b3_ref[...]

    # Sigmoid: exp + approx reciprocal both land on the EUP slot.
    o_ref[...] = pl.reciprocal(1.0 + jnp.exp(-z), approx=True)


def prepare_params(params):
    """Transpose to (out, in), pad hidden 64 -> 128, cast MXU operands to bf16."""
    w1, b1 = params["w1"], params["b1"]   # (D, 64), (1, 64)
    w2, b2 = params["w2"], params["b2"]   # (64, 64), (1, 64)
    w3, b3 = params["w3"], params["b3"]   # (64, 1), (1, 1)

    pad_h = HIDDEN_PAD - HIDDEN
    w1t = jnp.pad(w1.T, ((0, pad_h), (0, 0))).astype(jnp.bfloat16)        # (128, D)
    b1c = jnp.pad(b1.T, ((0, pad_h), (0, 0))).astype(jnp.float32)         # (128, 1)
    w2t = jnp.pad(w2.T, ((0, pad_h), (0, pad_h))).astype(jnp.bfloat16)    # (128, 128)
    b2c = jnp.pad(b2.T, ((0, pad_h), (0, 0))).astype(jnp.float32)         # (128, 1)
    w3c = jnp.pad(w3, ((0, pad_h), (0, 0))).astype(jnp.float32)           # (128, 1)
    b3c = b3.astype(jnp.float32)                                          # (1, 1)
    return w1t, b1c, w2t, b2c, w3c, b3c


@functools.partial(jax.jit, static_argnames=("tile_b",))
def pose_classifier_forward(x, params, *, tile_b=8192):
    """x: (B, D) float32. params: dict of w1,b1,w2,b2,w3,b3 (PyTorch-style layout)."""
    B, D = x.shape
    w1t, b1c, w2t, b2c, w3c, b3c = prepare_params(params)

    # Batch is the lane axis: pad it to a multiple of 128 (<=127 zero columns,
    # fused into the same pass as the transpose + bf16 cast below).
    b_pad = _round_up(B, LANE)
    # Tile: multiple of 128, large by default, but capped so the grid has at
    # least 2 steps when possible (lets v7x shard the batch over both TCs).
    tile_b = max(LANE, min(_round_up(tile_b, LANE),
                           _round_up(pl.cdiv(b_pad, 2), LANE)))
    grid_b = pl.cdiv(b_pad, tile_b)

    # Single rewrite of x: transpose + bf16 cast + batch pad in one XLA pass.
    xt = jnp.pad(x.T.astype(jnp.bfloat16), ((0, 0), (0, b_pad - B)))      # (D, b_pad)

    out_t = pl.pallas_call(
        _mlp_kernel,
        out_shape=jax.ShapeDtypeStruct((1, b_pad), jnp.float32),
        grid=(grid_b,),
        in_specs=[
            pl.BlockSpec((D, tile_b), lambda i: (0, i)),           # x^T: tiled over batch (lanes)
            pl.BlockSpec((HIDDEN_PAD, D), lambda i: (0, 0)),       # w1^T: VMEM-resident
            pl.BlockSpec((HIDDEN_PAD, 1), lambda i: (0, 0)),       # b1 (column)
            pl.BlockSpec((HIDDEN_PAD, HIDDEN_PAD), lambda i: (0, 0)),  # w2^T
            pl.BlockSpec((HIDDEN_PAD, 1), lambda i: (0, 0)),       # b2 (column)
            pl.BlockSpec((HIDDEN_PAD, 1), lambda i: (0, 0)),       # w3 (column, VPU)
            pl.BlockSpec((1, 1), lambda i: (0, 0)),                # b3
        ],
        out_specs=pl.BlockSpec((1, tile_b), lambda i: (0, i)),     # lane-dense output row
        compiler_params=pltpu.CompilerParams(
            dimension_semantics=("parallel",),
            vmem_limit_bytes=32 * 1024 * 1024,
        ),
    )(xt, w1t, b1c, w2t, b2c, w3c, b3c)

    # (1, b_pad) -> (B, 1); the reshape is layout-free.
    return out_t[:, :B].reshape(B, 1)


def init_params(key, input_dim, hidden=HIDDEN):
    """Deterministic init mimicking PyTorch nn.Linear defaults
    (uniform(-1/sqrt(fan_in), 1/sqrt(fan_in)) for weights and biases)."""
    ks = jax.random.split(key, 6)

    def linear(kw, kb, fan_in, fan_out):
        bound = 1.0 / jnp.sqrt(jnp.float32(fan_in))
        # stored as (in, out) so the reference can do x @ W
        w = jax.random.uniform(kw, (fan_in, fan_out), jnp.float32, -bound, bound)
        b = jax.random.uniform(kb, (1, fan_out), jnp.float32, -bound, bound)
        return w, b

    w1, b1 = linear(ks[0], ks[1], input_dim, hidden)
    w2, b2 = linear(ks[2], ks[3], hidden, hidden)
    w3, b3 = linear(ks[4], ks[5], hidden, 1)
    return {"w1": w1, "b1": b1, "w2": w2, "b2": b2, "w3": w3, "b3": b3}


def reference_forward(x, p):
    """Pure f32 reference matching PyTorch eval-mode semantics."""
    h1 = jnp.maximum(x @ p["w1"] + p["b1"], 0.0)
    h2 = jnp.maximum(h1 @ p["w2"] + p["b2"], 0.0)
    return jax.nn.sigmoid(h2 @ p["w3"] + p["b3"])


if __name__ == "__main__":
    key = jax.random.PRNGKey(0)
    k_in, k_par = jax.random.split(key)

    B, D = 8, 32  # small batch, 32-dim pose feature vector
    x = jax.random.normal(k_in, (B, D), jnp.float32)
    params = init_params(k_par, D)

    out = pose_classifier_forward(x, params)
    out = jax.block_until_ready(out)

    ref = reference_forward(x, params)
    assert out.shape == (B, 1)
    # bf16 MXU operands + approx reciprocal => loose tolerance vs f32 reference.
    assert jnp.allclose(out, ref, atol=2e-2, rtol=2e-2), (
        f"max abs err {jnp.max(jnp.abs(out - ref))}")

    print("KERNEL_OK")
</pallas_src>

<mosaic_0001>
module attributes {stable_mosaic.version = 11 : i64} {
  func.func @_mlp_kernel(%arg0: i32, %arg1: memref<32x128xbf16, #tpu.memory_space<vmem>>, %arg2: memref<128x32xbf16, #tpu.memory_space<vmem>>, %arg3: memref<128x1xf32, #tpu.memory_space<vmem>>, %arg4: memref<128x128xbf16, #tpu.memory_space<vmem>>, %arg5: memref<128x1xf32, #tpu.memory_space<vmem>>, %arg6: memref<128x1xf32, #tpu.memory_space<vmem>>, %arg7: memref<1x1xf32, #tpu.memory_space<vmem>>, %arg8: memref<1x128xf32, #tpu.memory_space<vmem>>) attributes {dimension_semantics = [#tpu.dimension_semantics<parallel>], iteration_bounds = array<i64: 1>, scalar_prefetch = 0 : i64, scratch_operands = 0 : i64, tpu.core_type = #tpu.core_type<tc>, window_params = [{transform_indices = @transform_0, window_bounds = array<i64: 32, 128>}, {pipeline_mode = #tpu.pipeline_mode<synchronous>, transform_indices = @transform_1, window_bounds = array<i64: 128, 32>}, {pipeline_mode = #tpu.pipeline_mode<synchronous>, transform_indices = @transform_2, window_bounds = array<i64: 128, 1>}, {pipeline_mode = #tpu.pipeline_mode<synchronous>, transform_indices = @transform_3, window_bounds = array<i64: 128, 128>}, {pipeline_mode = #tpu.pipeline_mode<synchronous>, transform_indices = @transform_4, window_bounds = array<i64: 128, 1>}, {pipeline_mode = #tpu.pipeline_mode<synchronous>, transform_indices = @transform_5, window_bounds = array<i64: 128, 1>}, {pipeline_mode = #tpu.pipeline_mode<synchronous>, transform_indices = @transform_6, window_bounds = array<i64: 1, 1>}, {transform_indices = @transform_7, window_bounds = array<i64: 1, 128>}]} {
    %c0 = arith.constant 0 : index
    %c0_0 = arith.constant 0 : index
    %0 = vector.load %arg1[%c0, %c0_0] : memref<32x128xbf16, #tpu.memory_space<vmem>>, vector<32x128xbf16>
    %c0_1 = arith.constant 0 : index
    %c0_2 = arith.constant 0 : index
    %1 = vector.load %arg2[%c0_1, %c0_2] : memref<128x32xbf16, #tpu.memory_space<vmem>>, vector<128x32xbf16>
    %cst = arith.constant dense<0.000000e+00> : vector<128x128xf32>
    %2 = tpu.matmul %1, %0, %cst {dimension_numbers = #tpu.dot_dimension_numbers<[1], [0], [0], [1], [0, 0, 1, 1], [], []>} : vector<128x32xbf16>, vector<32x128xbf16>, vector<128x128xf32> -> vector<128x128xf32>
    %c0_3 = arith.constant 0 : index
    %c0_4 = arith.constant 0 : index
    %3 = vector.load %arg3[%c0_3, %c0_4] : memref<128x1xf32, #tpu.memory_space<vmem>>, vector<128x1xf32>
    %4 = vector.broadcast %3 : vector<128x1xf32> to vector<128x128xf32>
    %5 = arith.addf %2, %4 : vector<128x128xf32>
    %cst_5 = arith.constant 0.000000e+00 : f32
    %6 = vector.broadcast %cst_5 : f32 to vector<128x128xf32>
    %7 = arith.maximumf %5, %6 : vector<128x128xf32>
    %c0_6 = arith.constant 0 : index
    %c0_7 = arith.constant 0 : index
    %8 = vector.load %arg4[%c0_6, %c0_7] : memref<128x128xbf16, #tpu.memory_space<vmem>>, vector<128x128xbf16>
    %9 = arith.truncf %7 : vector<128x128xf32> to vector<128x128xbf16>
    %cst_8 = arith.constant dense<0.000000e+00> : vector<128x128xf32>
    %10 = tpu.matmul %8, %9, %cst_8 {dimension_numbers = #tpu.dot_dimension_numbers<[1], [0], [0], [1], [0, 0, 1, 1], [], []>} : vector<128x128xbf16>, vector<128x128xbf16>, vector<128x128xf32> -> vector<128x128xf32>
    %c0_9 = arith.constant 0 : index
    %c0_10 = arith.constant 0 : index
    %11 = vector.load %arg5[%c0_9, %c0_10] : memref<128x1xf32, #tpu.memory_space<vmem>>, vector<128x1xf32>
    %12 = vector.broadcast %11 : vector<128x1xf32> to vector<128x128xf32>
    %13 = arith.addf %10, %12 : vector<128x128xf32>
    %cst_11 = arith.constant 0.000000e+00 : f32
    %14 = vector.broadcast %cst_11 : f32 to vector<128x128xf32>
    %15 = arith.maximumf %13, %14 : vector<128x128xf32>
    %c0_12 = arith.constant 0 : index
    %c0_13 = arith.constant 0 : index
    %16 = vector.load %arg6[%c0_12, %c0_13] : memref<128x1xf32, #tpu.memory_space<vmem>>, vector<128x1xf32>
    %17 = vector.broadcast %16 : vector<128x1xf32> to vector<128x128xf32>
    %18 = arith.mulf %15, %17 : vector<128x128xf32>
    %cst_14 = arith.constant dense<0.000000e+00> : vector<128xf32>
    %19 = vector.multi_reduction <add>, %18, %cst_14 [0] : vector<128x128xf32> to vector<128xf32>
    %20 = vector.shape_cast %19 : vector<128xf32> to vector<1x128xf32>
    %c0_15 = arith.constant 0 : index
    %c0_16 = arith.constant 0 : index
    %21 = vector.load %arg7[%c0_15, %c0_16] : memref<1x1xf32, #tpu.memory_space<vmem>>, vector<1x1xf32>
    %22 = vector.broadcast %21 : vector<1x1xf32> to vector<1x128xf32>
    %23 = arith.addf %20, %22 : vector<1x128xf32>
    %cst_17 = arith.constant 0.000000e+00 : f32
    %24 = vector.broadcast %cst_17 : f32 to vector<1x128xf32>
    %25 = arith.subf %24, %23 : vector<1x128xf32>
    %26 = math.exp %25 : vector<1x128xf32>
    %cst_18 = arith.constant 1.000000e+00 : f32
    %27 = vector.broadcast %cst_18 : f32 to vector<1x128xf32>
    %28 = arith.addf %27, %26 : vector<1x128xf32>
    %29 = tpu.reciprocal %28 {approx = true} : vector<1x128xf32> -> vector<1x128xf32>
    %c0_19 = arith.constant 0 : index
    %c0_20 = arith.constant 0 : index
    %30 = vector.load %arg8[%c0_19, %c0_20] : memref<1x128xf32, #tpu.memory_space<vmem>>, vector<1x128xf32>
    tpu.vector_store %arg8[%c0_19, %c0_20], %29 {strides = array<i32>} : memref<1x128xf32, #tpu.memory_space<vmem>>, vector<1x128xf32>,
    return
  }
  func.func @transform_0(%arg0: i32) -> (i32, i32) {
    %c0_i32 = arith.constant 0 : i32
    %c0_i32_0 = arith.constant 0 : i32
    return %c0_i32, %arg0 : i32, i32
  }
  func.func @transform_1(%arg0: i32) -> (i32, i32) {
    %c0_i32 = arith.constant 0 : i32
    %c0_i32_0 = arith.constant 0 : i32
    %c0_i32_1 = arith.constant 0 : i32
    return %c0_i32, %c0_i32_0 : i32, i32
  }
  func.func @transform_2(%arg0: i32) -> (i32, i32) {
    %c0_i32 = arith.constant 0 : i32
    %c0_i32_0 = arith.constant 0 : i32
    %c0_i32_1 = arith.constant 0 : i32
    return %c0_i32, %c0_i32_0 : i32, i32
  }
  func.func @transform_3(%arg0: i32) -> (i32, i32) {
    %c0_i32 = arith.constant 0 : i32
    %c0_i32_0 = arith.constant 0 : i32
    %c0_i32_1 = arith.constant 0 : i32
    return %c0_i32, %c0_i32_0 : i32, i32
  }
  func.func @transform_4(%arg0: i32) -> (i32, i32) {
    %c0_i32 = arith.constant 0 : i32
    %c0_i32_0 = arith.constant 0 : i32
    %c0_i32_1 = arith.constant 0 : i32
    return %c0_i32, %c0_i32_0 : i32, i32
  }
  func.func @transform_5(%arg0: i32) -> (i32, i32) {
    %c0_i32 = arith.constant 0 : i32
    %c0_i32_0 = arith.constant 0 : i32
    %c0_i32_1 = arith.constant 0 : i32
    return %c0_i32, %c0_i32_0 : i32, i32
  }
  func.func @transform_6(%arg0: i32) -> (i32, i32) {
    %c0_i32 = arith.constant 0 : i32
    %c0_i32_0 = arith.constant 0 : i32
    %c0_i32_1 = arith.constant 0 : i32
    return %c0_i32, %c0_i32_0 : i32, i32
  }
  func.func @transform_7(%arg0: i32) -> (i32, i32) {
    %c0_i32 = arith.constant 0 : i32
    %c0_i32_0 = arith.constant 0 : i32
    return %c0_i32, %arg0 : i32, i32
  }
}

</mosaic_0001>

<llo_original>
// kernel: pose_classifier_forward.1
$region0: #{pose_classifier_forward.1}
  #allocation0 [shape = 'u32[]', space=smem, size = 0x4, offset = 0x4, fixed_abs, tag = 'smem constant byte address 0x4 - core index']
  #allocation1 [shape = 'u32[144,128]{1,0:T(1,128)}', space=vmem, size = 0x12000, scoped, tag = 'internal scratch']
  #allocation2 [shape = 'f32[1,1]{1,0:T(1,128)S(1)}', space=vmem, size = 0x200, scoped, tag = 'scoped memory for pose_classifier_forward.1']
  %s0 = inlined_call_operand.vmem [shape: bf16[32,128], index: 0, kind: input, shape index: {}]
  %s1 = inlined_call_operand.vmem [shape: bf16[128,32], index: 1, kind: input, shape index: {}]
  %s2 = inlined_call_operand.vmem [shape: f32[128,1], index: 2, kind: input, shape index: {}]
  %s3 = inlined_call_operand.vmem [shape: bf16[128,128], index: 3, kind: input, shape index: {}]
  %s4 = inlined_call_operand.vmem [shape: f32[128,1], index: 4, kind: input, shape index: {}]
  %s5 = inlined_call_operand.vmem [shape: f32[128,1], index: 5, kind: input, shape index: {}]
  %s6 = inlined_call_operand.<no memory space> [shape: f32[1,1], index: 6, kind: input, shape index: {}]
  %s7 = inlined_call_operand.vmem [shape: f32[1,128], index: 7, kind: output, shape index: {}]
  %s8 = sld [smem:[#allocation0]]
  $region38: #{pose_classifier_forward.1} parent=0
    _
  %s10 = ssub.s32 1, %s8
  %s11 = scalar_select 0, %s10, %s8
  %v12 = vstv %s6
  %13 = vst [vmem:[#allocation2] sm:$0x1] %v12
  // Predicated region
  $region2: #{pose_classifier_forward.1} parent=0 // pred_check
    _
  $region3: #{pose_classifier_forward.1} parent=0 // pred_check_branch
    %15 = sbr.rel (0) target = $region5
  $region4: #{pose_classifier_forward.1} parent=0 // pred_region
    _
  $region5: #{pose_classifier_forward.1} parent=0 // pred_fallthru
    _
  // Predicated region
  $region6: #{pose_classifier_forward.1} parent=0 // pred_check
    _
  $region7: #{pose_classifier_forward.1} parent=0 // pred_check_branch
    %17 = sbr.rel (0) target = $region9
  $region8: #{pose_classifier_forward.1} parent=0 // pred_region
    _
  $region9: #{pose_classifier_forward.1} parent=0 // pred_fallthru
    _
  // Predicated region
  $region10: #{pose_classifier_forward.1} parent=0 // pred_check
    _
  $region11: #{pose_classifier_forward.1} parent=0 // pred_check_branch
    %19 = sbr.rel (0) target = $region13
  $region12: #{pose_classifier_forward.1} parent=0 // pred_region
    _
  $region13: #{pose_classifier_forward.1} parent=0 // pred_fallthru
    _
  // Predicated region
  $region14: #{pose_classifier_forward.1} parent=0 // pred_check
    _
  $region15: #{pose_classifier_forward.1} parent=0 // pred_check_branch
    %21 = sbr.rel (0) target = $region17
  $region16: #{pose_classifier_forward.1} parent=0 // pred_region
    _
  $region17: #{pose_classifier_forward.1} parent=0 // pred_fallthru
    _
  // Predicated region
  $region18: #{pose_classifier_forward.1} parent=0 // pred_check
    _
  $region19: #{pose_classifier_forward.1} parent=0 // pred_check_branch
    %23 = sbr.rel (0) target = $region21
  $region20: #{pose_classifier_forward.1} parent=0 // pred_region
    _
  $region21: #{pose_classifier_forward.1} parent=0 // pred_fallthru
    _
  // Predicated region
  $region22: #{pose_classifier_forward.1} parent=0 // pred_check
    _
  $region23: #{pose_classifier_forward.1} parent=0 // pred_check_branch
    %25 = sbr.rel (0) target = $region25
  $region24: #{pose_classifier_forward.1} parent=0 // pred_region
    _
  $region25: #{pose_classifier_forward.1} parent=0 // pred_fallthru
    _
  // Predicated region
  $region26: #{pose_classifier_forward.1} parent=0 // pred_check
    _
  $region27: #{pose_classifier_forward.1} parent=0 // pred_check_branch
    %27 = sbr.rel (0) target = $region29
  $region28: #{pose_classifier_forward.1} parent=0 // pred_region
    _
  $region29: #{pose_classifier_forward.1} parent=0 // pred_fallthru
    _
  %v29 = vld [vmem:[%s0] sm:$0xf]
  %v30 = vld [vmem:[%s0 + $0x4] sm:$0xf]
  %v31 = vld [vmem:[%s0 + $0x8] sm:$0xf]
  %v32 = vld [vmem:[%s0 + $0xc] sm:$0xf]
  %v33 = vld [vmem:[%s1] sm:$0xf]
  %v34 = vld [vmem:[%s1 + $0x4] sm:$0xf]
  %v35 = vld [vmem:[%s1 + $0x8] sm:$0xf]
  %v36 = vld [vmem:[%s1 + $0xc] sm:$0xf]
  %v37 = vld [vmem:[%s1 + $0x10] sm:$0xf]
  %v38 = vld [vmem:[%s1 + $0x14] sm:$0xf]
  %v39 = vld [vmem:[%s1 + $0x18] sm:$0xf]
  %v40 = vld [vmem:[%s1 + $0x1c] sm:$0xf]
  %v41 = vld [vmem:[%s1 + $0x20] sm:$0xf]
  %v42 = vld [vmem:[%s1 + $0x24] sm:$0xf]
  %v43 = vld [vmem:[%s1 + $0x28] sm:$0xf]
  %v44 = vld [vmem:[%s1 + $0x2c] sm:$0xf]
  %v45 = vld [vmem:[%s1 + $0x30] sm:$0xf]
  %v46 = vld [vmem:[%s1 + $0x34] sm:$0xf]
  %v47 = vld [vmem:[%s1 + $0x38] sm:$0xf]
  %v48 = vld [vmem:[%s1 + $0x3c] sm:$0xf]
  %v49 = vld [vmem:[%s2] sm:$0xff]
  %v50 = vld [vmem:[%s2 + $0x8] sm:$0xff]
  %v51 = vld [vmem:[%s2 + $0x10] sm:$0xff]
  %v52 = vld [vmem:[%s2 + $0x18] sm:$0xff]
  %v53 = vld [vmem:[%s2 + $0x20] sm:$0xff]
  %v54 = vld [vmem:[%s2 + $0x28] sm:$0xff]
  %v55 = vld [vmem:[%s2 + $0x30] sm:$0xff]
  %v56 = vld [vmem:[%s2 + $0x38] sm:$0xff]
  %v57 = vld [vmem:[%s2 + $0x40] sm:$0xff]
  %v58 = vld [vmem:[%s2 + $0x48] sm:$0xff]
  %v59 = vld [vmem:[%s2 + $0x50] sm:$0xff]
  %v60 = vld [vmem:[%s2 + $0x58] sm:$0xff]
  %v61 = vld [vmem:[%s2 + $0x60] sm:$0xff]
  %v62 = vld [vmem:[%s2 + $0x68] sm:$0xff]
  %v63 = vld [vmem:[%s2 + $0x70] sm:$0xff]
  %v64 = vld [vmem:[%s2 + $0x78] sm:$0xff]
  %66 = vset.pattern.permute.xlu0 0
  %67 = vperm.xlu0 %66, %v49
  %v68 = vpop.permute.xlu0 %67
  %71 = vset.pattern.permute.xlu0 0
  %72 = vperm.xlu0 %71, %v50
  %v73 = vpop.permute.xlu0 %72
  %76 = vset.pattern.permute.xlu0 0
  %77 = vperm.xlu0 %76, %v51
  %v78 = vpop.permute.xlu0 %77
  %81 = vset.pattern.permute.xlu0 0
  %82 = vperm.xlu0 %81, %v52
  %v83 = vpop.permute.xlu0 %82
  %86 = vset.pattern.permute.xlu0 0
  %87 = vperm.xlu0 %86, %v53
  %v88 = vpop.permute.xlu0 %87
  %91 = vset.pattern.permute.xlu0 0
  %92 = vperm.xlu0 %91, %v54
  %v93 = vpop.permute.xlu0 %92
  %96 = vset.pattern.permute.xlu0 0
  %97 = vperm.xlu0 %96, %v55
  %v98 = vpop.permute.xlu0 %97
  %101 = vset.pattern.permute.xlu0 0
  %102 = vperm.xlu0 %101, %v56
  %v103 = vpop.permute.xlu0 %102
  %106 = vset.pattern.permute.xlu0 0
  %107 = vperm.xlu0 %106, %v57
  %v108 = vpop.permute.xlu0 %107
  %111 = vset.pattern.permute.xlu0 0
  %112 = vperm.xlu0 %111, %v58
  %v113 = vpop.permute.xlu0 %112
  %116 = vset.pattern.permute.xlu0 0
  %117 = vperm.xlu0 %116, %v59
  %v118 = vpop.permute.xlu0 %117
  %121 = vset.pattern.permute.xlu0 0
  %122 = vperm.xlu0 %121, %v60
  %v123 = vpop.permute.xlu0 %122
  %126 = vset.pattern.permute.xlu0 0
  %127 = vperm.xlu0 %126, %v61
  %v128 = vpop.permute.xlu0 %127
  %131 = vset.pattern.permute.xlu0 0
  %132 = vperm.xlu0 %131, %v62
  %v133 = vpop.permute.xlu0 %132
  %136 = vset.pattern.permute.xlu0 0
  %137 = vperm.xlu0 %136, %v63
  %v138 = vpop.permute.xlu0 %137
  %141 = vset.pattern.permute.xlu0 0
  %142 = vperm.xlu0 %141, %v64
  %v143 = vpop.permute.xlu0 %142
  %v161 = vunpack.c.l.b16 %v33
  %v162 = vunpack.c.l.b16 %v34
  %v163 = vunpack.c.l.b16 %v35
  %v164 = vunpack.c.l.b16 %v36
  %v165 = vunpack.c.l.b16 %v37
  %v166 = vunpack.c.l.b16 %v38
  %v167 = vunpack.c.l.b16 %v39
  %v168 = vunpack.c.l.b16 %v40
  %v169 = vunpack.c.l.b16 %v41
  %v170 = vunpack.c.l.b16 %v42
  %v171 = vunpack.c.l.b16 %v43
  %v172 = vunpack.c.l.b16 %v44
  %v173 = vunpack.c.l.b16 %v45
  %v174 = vunpack.c.l.b16 %v46
  %v175 = vunpack.c.l.b16 %v47
  %v176 = vunpack.c.l.b16 %v48
  %v177 = vpack.c.b16 %v162, %v161
  %v178 = vpack.c.b16 %v164, %v163
  %v179 = vpack.c.b16 %v166, %v165
  %v180 = vpack.c.b16 %v168, %v167
  %v181 = vpack.c.b16 %v170, %v169
  %v182 = vpack.c.b16 %v172, %v171
  %v183 = vpack.c.b16 %v174, %v173
  %v184 = vpack.c.b16 %v176, %v175
  %v189 = vunpack.c.l.b16 %v29
  %v190 = vunpack.c.l.b16 %v30
  %v191 = vunpack.c.l.b16 %v31
  %v192 = vunpack.c.l.b16 %v32
  %v193 = vpack.c.b16 %v190, %v189
  %v194 = vpack.c.b16 %v192, %v191
  %vm197 = vcmask 261120
  %v199 = vsel %vm197, %v177, 0
  %v202 = vsel %vm197, %v178, 0
  %v205 = vsel %vm197, %v179, 0
  %v208 = vsel %vm197, %v180, 0
  %v211 = vsel %vm197, %v181, 0
  %v214 = vsel %vm197, %v182, 0
  %v217 = vsel %vm197, %v183, 0
  %v220 = vsel %vm197, %v184, 0
  %222 = vmatprep.subr.bf16.mxu0 0
  %223 = vmatpush1.bf16.msra.mxu0 0
  %224 = vmatprep.subr.bf16.mxu0 0
  %225 = vmatpush1.bf16.msra.mxu0 0
  %226 = vmatprep.subr.bf16.mxu0 0
  %227 = vmatpush1.bf16.msra.mxu0 0
  %228 = vmatprep.subr.bf16.mxu0 0
  %229 = vmatpush1.bf16.msra.mxu0 0
  %230 = vmatprep.subr.bf16.mxu0 0
  %231 = vmatpush1.bf16.msra.mxu0 0
  %232 = vmatprep.subr.bf16.mxu0 0
  %233 = vmatpush1.bf16.msra.mxu0 0
  %234 = vmatprep.subr.bf16.mxu0 0
  %235 = vmatpush1.bf16.msra.mxu0 %v194
  %236 = vmatprep.subr.bf16.mxu0 0
  %237 = vmatpush1.bf16.msra.mxu0 %v193
  %238 = vmatprep.subr.bf16.mxu0 0
  %239 = vmatpush2.bf16.msra.mxu0 0
  %240 = vmatprep.subr.bf16.mxu0 0
  %241 = vmatpush2.bf16.msra.mxu0 0
  %242 = vmatprep.subr.bf16.mxu0 0
  %243 = vmatpush2.bf16.msra.mxu0 0
  %244 = vmatprep.subr.bf16.mxu0 0
  %245 = vmatpush2.bf16.msra.mxu0 0
  %246 = vmatprep.subr.bf16.mxu0 0
  %247 = vmatpush2.bf16.msra.mxu0 0
  %248 = vmatprep.subr.bf16.mxu0 0
  %249 = vmatpush2.bf16.msra.mxu0 0
  %250 = vmatprep.subr.bf16.mxu0 0
  %251 = vmatpush2.bf16.msra.mxu0 0
  %252 = vmatprep.subr.bf16.mxu0 0
  %253 = vmatpush2.bf16.msra.mxu0 0
  %254 = vmatprep.mubr.bf16.mxu0 0
  %255 = vmatmul.mubr.bf16.gmra.mxu0 %v199
  %v256 = vpop.f32.mrf.mxu0
  %v257 = vadd.f32 %v68, %v256
  %v258 = vpop.f32.mrf.mxu0
  %v259 = vpop.f32.mrf.mxu0
  %v260 = vadd.f32 %v73, %v259
  %v261 = vpop.f32.mrf.mxu0
  %262 = vmatprep.mubr.bf16.mxu0 0
  %263 = vmatmul.mubr.bf16.gmra.mxu0 %v202
  %v264 = vpop.f32.mrf.mxu0
  %v265 = vadd.f32 %v78, %v264
  %v266 = vpop.f32.mrf.mxu0
  %v267 = vpop.f32.mrf.mxu0
  %v268 = vadd.f32 %v83, %v267
  %v269 = vpop.f32.mrf.mxu0
  %270 = vmatprep.mubr.bf16.mxu0 0
  %271 = vmatmul.mubr.bf16.gmra.mxu0 %v205
  %v272 = vpop.f32.mrf.mxu0
  %v273 = vadd.f32 %v88, %v272
  %v274 = vpop.f32.mrf.mxu0
  %v275 = vpop.f32.mrf.mxu0
  %v276 = vadd.f32 %v93, %v275
  %v277 = vpop.f32.mrf.mxu0
  %278 = vmatprep.mubr.bf16.mxu0 0
  %279 = vmatmul.mubr.bf16.gmra.mxu0 %v208
  %v280 = vpop.f32.mrf.mxu0
  %v281 = vadd.f32 %v98, %v280
  %v282 = vpop.f32.mrf.mxu0
  %v283 = vpop.f32.mrf.mxu0
  %v284 = vadd.f32 %v103, %v283
  %v285 = vpop.f32.mrf.mxu0
  %286 = vmatprep.mubr.bf16.mxu0 0
  %287 = vmatmul.mubr.bf16.gmra.mxu0 %v211
  %v288 = vpop.f32.mrf.mxu0
  %v289 = vadd.f32 %v108, %v288
  %v290 = vpop.f32.mrf.mxu0
  %v291 = vpop.f32.mrf.mxu0
  %v292 = vadd.f32 %v113, %v291
  %v293 = vpop.f32.mrf.mxu0
  %294 = vmatprep.mubr.bf16.mxu0 0
  %295 = vmatmul.mubr.bf16.gmra.mxu0 %v214
  %v296 = vpop.f32.mrf.mxu0
  %v297 = vadd.f32 %v118, %v296
  %v298 = vpop.f32.mrf.mxu0
  %v299 = vpop.f32.mrf.mxu0
  %v300 = vadd.f32 %v123, %v299
  %v301 = vpop.f32.mrf.mxu0
  %302 = vmatprep.mubr.bf16.mxu0 0
  %303 = vmatmul.mubr.bf16.gmra.mxu0 %v217
  %v304 = vpop.f32.mrf.mxu0
  %v305 = vadd.f32 %v128, %v304
  %v306 = vpop.f32.mrf.mxu0
  %v307 = vpop.f32.mrf.mxu0
  %v308 = vadd.f32 %v133, %v307
  %v309 = vpop.f32.mrf.mxu0
  %310 = vmatprep.mubr.bf16.mxu0 0
  %311 = vmatmul.mubr.bf16.gmra.mxu0 %v220
  %v312 = vpop.f32.mrf.mxu0
  %v313 = vadd.f32 %v138, %v312
  %v314 = vpop.f32.mrf.mxu0
  %v315 = vpop.f32.mrf.mxu0
  %v316 = vadd.f32 %v143, %v315
  %v317 = vpop.f32.mrf.mxu0
  %318 = vdwg.mxu0
  %v319 = vmax.f32 %v257, 0.0
  %v320 = vmax.f32 %v260, 0.0
  %v321 = vmax.f32 %v265, 0.0
  %v322 = vmax.f32 %v268, 0.0
  %v323 = vmax.f32 %v273, 0.0
  %v324 = vmax.f32 %v276, 0.0
  %v325 = vmax.f32 %v281, 0.0
  %v326 = vmax.f32 %v284, 0.0
  %v327 = vmax.f32 %v289, 0.0
  %v328 = vmax.f32 %v292, 0.0
  %v329 = vmax.f32 %v297, 0.0
  %v330 = vmax.f32 %v300, 0.0
  %v331 = vmax.f32 %v305, 0.0
  %v332 = vmax.f32 %v308, 0.0
  %v333 = vmax.f32 %v313, 0.0
  %v334 = vmax.f32 %v316, 0.0
  %v335 = vld [vmem:[%s3] sm:$0xf]
  %v336 = vld [vmem:[%s3 + $0x4] sm:$0xf]
  %v337 = vld [vmem:[%s3 + $0x8] sm:$0xf]
  %v338 = vld [vmem:[%s3 + $0xc] sm:$0xf]
  %v339 = vld [vmem:[%s3 + $0x10] sm:$0xf]
  %v340 = vld [vmem:[%s3 + $0x14] sm:$0xf]
  %v341 = vld [vmem:[%s3 + $0x18] sm:$0xf]
  %v342 = vld [vmem:[%s3 + $0x1c] sm:$0xf]
  %v343 = vld [vmem:[%s3 + $0x20] sm:$0xf]
  %v344 = vld [vmem:[%s3 + $0x24] sm:$0xf]
  %v345 = vld [vmem:[%s3 + $0x28] sm:$0xf]
  %v346 = vld [vmem:[%s3 + $0x2c] sm:$0xf]
  %v347 = vld [vmem:[%s3 + $0x30] sm:$0xf]
  %v348 = vld [vmem:[%s3 + $0x34] sm:$0xf]
  %v349 = vld [vmem:[%s3 + $0x38] sm:$0xf]
  %v350 = vld [vmem:[%s3 + $0x3c] sm:$0xf]
  %v351 = vpack.c.bf16 %v320, %v319
  %v352 = vpack.c.bf16 %v322, %v321
  %v353 = vpack.c.bf16 %v324, %v323
  %v354 = vpack.c.bf16 %v326, %v325
  %v355 = vpack.c.bf16 %v328, %v327
  %v356 = vpack.c.bf16 %v330, %v329
  %v357 = vpack.c.bf16 %v332, %v331
  %v358 = vpack.c.bf16 %v334, %v333
  %v359 = vld [vmem:[%s4] sm:$0xff]
  %v360 = vld [vmem:[%s4 + $0x8] sm:$0xff]
  %v361 = vld [vmem:[%s4 + $0x10] sm:$0xff]
  %v362 = vld [vmem:[%s4 + $0x18] sm:$0xff]
  %v363 = vld [vmem:[%s4 + $0x20] sm:$0xff]
  %v364 = vld [vmem:[%s4 + $0x28] sm:$0xff]
  %v365 = vld [vmem:[%s4 + $0x30] sm:$0xff]
  %v366 = vld [vmem:[%s4 + $0x38] sm:$0xff]
  %v367 = vld [vmem:[%s4 + $0x40] sm:$0xff]
  %v368 = vld [vmem:[%s4 + $0x48] sm:$0xff]
  %v369 = vld [vmem:[%s4 + $0x50] sm:$0xff]
  %v370 = vld [vmem:[%s4 + $0x58] sm:$0xff]
  %v371 = vld [vmem:[%s4 + $0x60] sm:$0xff]
  %v372 = vld [vmem:[%s4 + $0x68] sm:$0xff]
  %v373 = vld [vmem:[%s4 + $0x70] sm:$0xff]
  %v374 = vld [vmem:[%s4 + $0x78] sm:$0xff]
  %376 = vset.pattern.permute.xlu0 0
  %377 = vperm.xlu0 %376, %v359
  %v378 = vpop.permute.xlu0 %377
  %381 = vset.pattern.permute.xlu0 0
  %382 = vperm.xlu0 %381, %v360
  %v383 = vpop.permute.xlu0 %382
  %386 = vset.pattern.permute.xlu0 0
  %387 = vperm.xlu0 %386, %v361
  %v388 = vpop.permute.xlu0 %387
  %391 = vset.pattern.permute.xlu0 0
  %392 = vperm.xlu0 %391, %v362
  %v393 = vpop.permute.xlu0 %392
  %396 = vset.pattern.permute.xlu0 0
  %397 = vperm.xlu0 %396, %v363
  %v398 = vpop.permute.xlu0 %397
  %401 = vset.pattern.permute.xlu0 0
  %402 = vperm.xlu0 %401, %v364
  %v403 = vpop.permute.xlu0 %402
  %406 = vset.pattern.permute.xlu0 0
  %407 = vperm.xlu0 %406, %v365
  %v408 = vpop.permute.xlu0 %407
  %411 = vset.pattern.permute.xlu0 0
  %412 = vperm.xlu0 %411, %v366
  %v413 = vpop.permute.xlu0 %412
  %416 = vset.pattern.permute.xlu0 0
  %417 = vperm.xlu0 %416, %v367
  %v418 = vpop.permute.xlu0 %417
  %421 = vset.pattern.permute.xlu0 0
  %422 = vperm.xlu0 %421, %v368
  %v423 = vpop.permute.xlu0 %422
  %426 = vset.pattern.permute.xlu0 0
  %427 = vperm.xlu0 %426, %v369
  %v428 = vpop.permute.xlu0 %427
  %431 = vset.pattern.permute.xlu0 0
  %432 = vperm.xlu0 %431, %v370
  %v433 = vpop.permute.xlu0 %432
  %436 = vset.pattern.permute.xlu0 0
  %437 = vperm.xlu0 %436, %v371
  %v438 = vpop.permute.xlu0 %437
  %441 = vset.pattern.permute.xlu0 0
  %442 = vperm.xlu0 %441, %v372
  %v443 = vpop.permute.xlu0 %442
  %446 = vset.pattern.permute.xlu0 0
  %447 = vperm.xlu0 %446, %v373
  %v448 = vpop.permute.xlu0 %447
  %451 = vset.pattern.permute.xlu0 0
  %452 = vperm.xlu0 %451, %v374
  %v453 = vpop.permute.xlu0 %452
  %v471 = vunpack.c.l.b16 %v335
  %v472 = vunpack.c.l.b16 %v336
  %v473 = vunpack.c.l.b16 %v337
  %v474 = vunpack.c.l.b16 %v338
  %v475 = vunpack.c.l.b16 %v339
  %v476 = vunpack.c.l.b16 %v340
  %v477 = vunpack.c.l.b16 %v341
  %v478 = vunpack.c.l.b16 %v342
  %v479 = vunpack.c.l.b16 %v343
  %v480 = vunpack.c.l.b16 %v344
  %v481 = vunpack.c.l.b16 %v345
  %v482 = vunpack.c.l.b16 %v346
  %v483 = vunpack.c.l.b16 %v347
  %v484 = vunpack.c.l.b16 %v348
  %v485 = vunpack.c.l.b16 %v349
  %v486 = vunpack.c.l.b16 %v350
  %v487 = vpack.c.b16 %v472, %v471
  %v488 = vpack.c.b16 %v474, %v473
  %v489 = vpack.c.b16 %v476, %v475
  %v490 = vpack.c.b16 %v478, %v477
  %v491 = vpack.c.b16 %v480, %v479
  %v492 = vpack.c.b16 %v482, %v481
  %v493 = vpack.c.b16 %v484, %v483
  %v494 = vpack.c.b16 %v486, %v485
  %503 = vmatprep.subr.bf16.mxu0 0
  %504 = vmatpush1.bf16.msra.mxu0 %v358
  %505 = vmatprep.subr.bf16.mxu0 0
  %506 = vmatpush1.bf16.msra.mxu0 %v357
  %507 = vmatprep.subr.bf16.mxu0 0
  %508 = vmatpush1.bf16.msra.mxu0 %v356
  %509 = vmatprep.subr.bf16.mxu0 0
  %510 = vmatpush1.bf16.msra.mxu0 %v355
  %511 = vmatprep.subr.bf16.mxu0 0
  %512 = vmatpush1.bf16.msra.mxu0 %v354
  %513 = vmatprep.subr.bf16.mxu0 0
  %514 = vmatpush1.bf16.msra.mxu0 %v353
  %515 = vmatprep.subr.bf16.mxu0 0
  %516 = vmatpush1.bf16.msra.mxu0 %v352
  %517 = vmatprep.subr.bf16.mxu0 0
  %518 = vmatpush1.bf16.msra.mxu0 %v351
  %519 = vmatprep.subr.bf16.mxu0 0
  %520 = vmatpush2.bf16.msra.mxu0 0
  %521 = vmatprep.subr.bf16.mxu0 0
  %522 = vmatpush2.bf16.msra.mxu0 0
  %523 = vmatprep.subr.bf16.mxu0 0
  %524 = vmatpush2.bf16.msra.mxu0 0
  %525 = vmatprep.subr.bf16.mxu0 0
  %526 = vmatpush2.bf16.msra.mxu0 0
  %527 = vmatprep.subr.bf16.mxu0 0
  %528 = vmatpush2.bf16.msra.mxu0 0
  %529 = vmatprep.subr.bf16.mxu0 0
  %530 = vmatpush2.bf16.msra.mxu0 0
  %531 = vmatprep.subr.bf16.mxu0 0
  %532 = vmatpush2.bf16.msra.mxu0 0
  %533 = vmatprep.subr.bf16.mxu0 0
  %534 = vmatpush2.bf16.msra.mxu0 0
  %535 = vmatprep.mubr.bf16.mxu0 0
  %536 = vmatmul.mubr.bf16.gmra.mxu0 %v487
  %v537 = vpop.f32.mrf.mxu0
  %v538 = vadd.f32 %v378, %v537
  %v539 = vpop.f32.mrf.mxu0
  %v540 = vpop.f32.mrf.mxu0
  %v541 = vadd.f32 %v383, %v540
  %v542 = vpop.f32.mrf.mxu0
  %543 = vmatprep.mubr.bf16.mxu0 0
  %544 = vmatmul.mubr.bf16.gmra.mxu0 %v488
  %v545 = vpop.f32.mrf.mxu0
  %v546 = vadd.f32 %v388, %v545
  %v547 = vpop.f32.mrf.mxu0
  %v548 = vpop.f32.mrf.mxu0
  %v549 = vadd.f32 %v393, %v548
  %v550 = vpop.f32.mrf.mxu0
  %551 = vmatprep.mubr.bf16.mxu0 0
  %552 = vmatmul.mubr.bf16.gmra.mxu0 %v489
  %v553 = vpop.f32.mrf.mxu0
  %v554 = vadd.f32 %v398, %v553
  %v555 = vpop.f32.mrf.mxu0
  %v556 = vpop.f32.mrf.mxu0
  %v557 = vadd.f32 %v403, %v556
  %v558 = vpop.f32.mrf.mxu0
  %559 = vmatprep.mubr.bf16.mxu0 0
  %560 = vmatmul.mubr.bf16.gmra.mxu0 %v490
  %v561 = vpop.f32.mrf.mxu0
  %v562 = vadd.f32 %v408, %v561
  %v563 = vpop.f32.mrf.mxu0
  %v564 = vpop.f32.mrf.mxu0
  %v565 = vadd.f32 %v413, %v564
  %v566 = vpop.f32.mrf.mxu0
  %567 = vmatprep.mubr.bf16.mxu0 0
  %568 = vmatmul.mubr.bf16.gmra.mxu0 %v491
  %v569 = vpop.f32.mrf.mxu0
  %v570 = vadd.f32 %v418, %v569
  %v571 = vpop.f32.mrf.mxu0
  %v572 = vpop.f32.mrf.mxu0
  %v573 = vadd.f32 %v423, %v572
  %v574 = vpop.f32.mrf.mxu0
  %575 = vmatprep.mubr.bf16.mxu0 0
  %576 = vmatmul.mubr.bf16.gmra.mxu0 %v492
  %v577 = vpop.f32.mrf.mxu0
  %v578 = vadd.f32 %v428, %v577
  %v579 = vpop.f32.mrf.mxu0
  %v580 = vpop.f32.mrf.mxu0
  %v581 = vadd.f32 %v433, %v580
  %v582 = vpop.f32.mrf.mxu0
  %583 = vmatprep.mubr.bf16.mxu0 0
  %584 = vmatmul.mubr.bf16.gmra.mxu0 %v493
  %v585 = vpop.f32.mrf.mxu0
  %v586 = vadd.f32 %v438, %v585
  %v587 = vpop.f32.mrf.mxu0
  %v588 = vpop.f32.mrf.mxu0
  %v589 = vadd.f32 %v443, %v588
  %v590 = vpop.f32.mrf.mxu0
  %591 = vmatprep.mubr.bf16.mxu0 0
  %592 = vmatmul.mubr.bf16.gmra.mxu0 %v494
  %v593 = vpop.f32.mrf.mxu0
  %v594 = vadd.f32 %v448, %v593
  %v595 = vpop.f32.mrf.mxu0
  %v596 = vpop.f32.mrf.mxu0
  %v597 = vadd.f32 %v453, %v596
  %v598 = vpop.f32.mrf.mxu0
  %599 = vdwg.mxu0
  %v600 = vmax.f32 %v538, 0.0
  %v601 = vmax.f32 %v541, 0.0
  %v602 = vmax.f32 %v546, 0.0
  %v603 = vmax.f32 %v549, 0.0
  %v604 = vmax.f32 %v554, 0.0
  %v605 = vmax.f32 %v557, 0.0
  %v606 = vmax.f32 %v562, 0.0
  %v607 = vmax.f32 %v565, 0.0
  %v608 = vmax.f32 %v570, 0.0
  %v609 = vmax.f32 %v573, 0.0
  %v610 = vmax.f32 %v578, 0.0
  %v611 = vmax.f32 %v581, 0.0
  %v612 = vmax.f32 %v586, 0.0
  %v613 = vmax.f32 %v589, 0.0
  %v614 = vmax.f32 %v594, 0.0
  %v615 = vmax.f32 %v597, 0.0
  %v616 = vld [vmem:[%s5] sm:$0xff]
  %v617 = vld [vmem:[%s5 + $0x8] sm:$0xff]
  %v618 = vld [vmem:[%s5 + $0x10] sm:$0xff]
  %v619 = vld [vmem:[%s5 + $0x18] sm:$0xff]
  %v620 = vld [vmem:[%s5 + $0x20] sm:$0xff]
  %v621 = vld [vmem:[%s5 + $0x28] sm:$0xff]
  %v622 = vld [vmem:[%s5 + $0x30] sm:$0xff]
  %v623 = vld [vmem:[%s5 + $0x38] sm:$0xff]
  %v624 = vld [vmem:[%s5 + $0x40] sm:$0xff]
  %v625 = vld [vmem:[%s5 + $0x48] sm:$0xff]
  %v626 = vld [vmem:[%s5 + $0x50] sm:$0xff]
  %v627 = vld [vmem:[%s5 + $0x58] sm:$0xff]
  %v628 = vld [vmem:[%s5 + $0x60] sm:$0xff]
  %v629 = vld [vmem:[%s5 + $0x68] sm:$0xff]
  %v630 = vld [vmem:[%s5 + $0x70] sm:$0xff]
  %v631 = vld [vmem:[%s5 + $0x78] sm:$0xff]
  %633 = vset.pattern.permute.xlu0 0
  %634 = vperm.xlu0 %633, %v616
  %v635 = vpop.permute.xlu0 %634
  %638 = vset.pattern.permute.xlu0 0
  %639 = vperm.xlu0 %638, %v617
  %v640 = vpop.permute.xlu0 %639
  %643 = vset.pattern.permute.xlu0 0
  %644 = vperm.xlu0 %643, %v618
  %v645 = vpop.permute.xlu0 %644
  %648 = vset.pattern.permute.xlu0 0
  %649 = vperm.xlu0 %648, %v619
  %v650 = vpop.permute.xlu0 %649
  %653 = vset.pattern.permute.xlu0 0
  %654 = vperm.xlu0 %653, %v620
  %v655 = vpop.permute.xlu0 %654
  %658 = vset.pattern.permute.xlu0 0
  %659 = vperm.xlu0 %658, %v621
  %v660 = vpop.permute.xlu0 %659
  %663 = vset.pattern.permute.xlu0 0
  %664 = vperm.xlu0 %663, %v622
  %v665 = vpop.permute.xlu0 %664
  %668 = vset.pattern.permute.xlu0 0
  %669 = vperm.xlu0 %668, %v623
  %v670 = vpop.permute.xlu0 %669
  %673 = vset.pattern.permute.xlu0 0
  %674 = vperm.xlu0 %673, %v624
  %v675 = vpop.permute.xlu0 %674
  %678 = vset.pattern.permute.xlu0 0
  %679 = vperm.xlu0 %678, %v625
  %v680 = vpop.permute.xlu0 %679
  %683 = vset.pattern.permute.xlu0 0
  %684 = vperm.xlu0 %683, %v626
  %v685 = vpop.permute.xlu0 %684
  %688 = vset.pattern.permute.xlu0 0
  %689 = vperm.xlu0 %688, %v627
  %v690 = vpop.permute.xlu0 %689
  %693 = vset.pattern.permute.xlu0 0
  %694 = vperm.xlu0 %693, %v628
  %v695 = vpop.permute.xlu0 %694
  %698 = vset.pattern.permute.xlu0 0
  %699 = vperm.xlu0 %698, %v629
  %v700 = vpop.permute.xlu0 %699
  %703 = vset.pattern.permute.xlu0 0
  %704 = vperm.xlu0 %703, %v630
  %v705 = vpop.permute.xlu0 %704
  %708 = vset.pattern.permute.xlu0 0
  %709 = vperm.xlu0 %708, %v631
  %v710 = vpop.permute.xlu0 %709
  %v712 = vmul.f32 %v600, %v635
  %v713 = vmul.f32 %v601, %v640
  %v714 = vmul.f32 %v602, %v645
  %v715 = vmul.f32 %v603, %v650
  %v716 = vmul.f32 %v604, %v655
  %v717 = vmul.f32 %v605, %v660
  %v718 = vmul.f32 %v606, %v665
  %v719 = vmul.f32 %v607, %v670
  %v720 = vmul.f32 %v608, %v675
  %v721 = vmul.f32 %v609, %v680
  %v722 = vmul.f32 %v610, %v685
  %v723 = vmul.f32 %v611, %v690
  %v724 = vmul.f32 %v612, %v695
  %v725 = vmul.f32 %v613, %v700
  %v726 = vmul.f32 %v614, %v705
  %v727 = vmul.f32 %v615, %v710
  %v728 = vadd.f32 %v712, %v713
  %v729 = vadd.f32 %v728, %v714
  %v730 = vadd.f32 %v729, %v715
  %v731 = vadd.f32 %v730, %v716
  %v732 = vadd.f32 %v731, %v717
  %v733 = vadd.f32 %v732, %v718
  %v734 = vadd.f32 %v733, %v719
  %v735 = vadd.f32 %v734, %v720
  %v736 = vadd.f32 %v735, %v721
  %v737 = vadd.f32 %v736, %v722
  %v738 = vadd.f32 %v737, %v723
  %v739 = vadd.f32 %v738, %v724
  %v740 = vadd.f32 %v739, %v725
  %v741 = vadd.f32 %v740, %v726
  %v742 = vadd.f32 %v741, %v727
  %v743 = vrot.slane %v742, 4
  %v744 = vadd.f32 %v742, %v743
  %v745 = vrot.slane %v744, 2
  %v746 = vadd.f32 %v744, %v745
  %v747 = vrot.slane %v746, 1
  %v748 = vadd.f32 %v746, %v747
  %v749 = vld [vmem:[#allocation2] sm:$0x1]
  %751 = vset.pattern.permute.xlu0 0
  %752 = vperm.xlu0 %751, %v749
  %v753 = vpop.permute.xlu0 %752
  %v755 = vlaneseq
  %v756 = vshrl.u32 %v755, 7
  %v757 = vsub.s32 0, %v756
  %v758 = vrot.slane %v753, %v757
  %v759 = vadd.f32 %v748, %v758
  %v760 = vsub.f32 0.0, %v759
  %v761 = vmul.f32 %v760, 1.442695
  %v762 = vpow.pop %v761
  %v763 = vadd.f32 %v762, 1.0
  %v764 = vrcp.pop %v763
  %765 = vst [vmem:[%s7] sm:$0x1] %v764
  // Predicated region
  $region30: #{pose_classifier_forward.1} parent=0 // pred_check
    _
  $region31: #{pose_classifier_forward.1} parent=0 // pred_check_branch
    %767 = sbr.rel (0) target = $region33
  $region32: #{pose_classifier_forward.1} parent=0 // pred_region
    _
  $region33: #{pose_classifier_forward.1} parent=0 // pred_fallthru
    _
  // Predicated region
  $region34: #{pose_classifier_forward.1} parent=0 // pred_check
    _
  $region35: #{pose_classifier_forward.1} parent=0 // pred_check_branch
    %769 = sbr.rel (0) target = $region37
  $region36: #{pose_classifier_forward.1} parent=0 // pred_region
    _
  $region37: #{pose_classifier_forward.1} parent=0 // pred_fallthru
    _

</llo_original>
